<compile_context>
chip_gen: v7x
topology: tpu7x:2x2x1
jax: 0.10.0
libtpu: 0.0.40
codegen_flags: <defaults>
</compile_context>

<pallas_src>
import jax
import jax.numpy as jnp
from jax.experimental import pallas as pl
from jax.experimental.pallas import tpu as pltpu


def _prop_kernel(m_ref, w_ref, b_ref, x_ref, o_ref):
    """One grid step processes `block_b` batch elements.

    m_ref: (N, N)                    VMEM  precomputed propagation matrix
    w_ref: (c_out, c_in)             VMEM  1x1-conv weight
    b_ref: (c_out, 1)                VMEM  1x1-conv bias (f32 column)
    x_ref: (block_b, c_in, N, L)     VMEM  input in native NCHW layout
    o_ref: (block_b, c_out, N * L)   VMEM  lane-dense output
    """
    block_b, C, N, L = x_ref.shape
    m = m_ref[...]           # (N, N)
    w = w_ref[...]           # (c_out, C)
    bias = b_ref[...]        # (c_out, 1) f32

    for i in range(block_b):                     # unrolled; block_b is small
        xb = x_ref[i]                            # (C, N, L)

        # relayout: (C, N, L) -> (N, C*L) so the node mixing is one 2D matmul
        x2 = jnp.transpose(xb, (1, 0, 2)).reshape(N, C * L)

        # h[w, (c,l)] = sum_n M[w,n] * x[c,n,l]        (MXU, f32 accumulate)
        h = jnp.dot(m, x2, preferred_element_type=jnp.float32)      # (N, C*L)

        # relayout: (N, C*L) -> (C, N*L) so the 1x1 conv is one 2D matmul
        h2 = jnp.transpose(h.reshape(N, C, L), (1, 0, 2)).reshape(C, N * L)

        # out[o, (w,l)] = sum_c W[o,c] * h2[c, (w,l)] + b[o]
        out2 = jnp.dot(w, h2.astype(w.dtype),
                       preferred_element_type=jnp.float32) + bias   # (c_out, N*L)
        o_ref[i] = out2.astype(o_ref.dtype)


def _propagation_matrix(adj, gdep, alpha):
    """M such that h_gdep[b,c,w,l] = sum_n M[w,n] x[b,c,n,l] (batch-invariant)."""
    N = adj.shape[0]
    eye = jnp.eye(N, dtype=jnp.float32)
    a = adj.astype(jnp.float32) + eye
    a = a / jnp.sum(a, axis=1, keepdims=True)
    at = a.T                                  # node-mixing operator A = a^T
    m = eye
    for _ in range(gdep):                     # same recursion as the forward
        m = alpha * eye + (1.0 - alpha) * (at @ m)
    return m


def _pick_block_b(batch, per_batch_tile_bytes, *, target_bytes=2 << 20,
                  vmem_budget=24 << 20, min_steps=2, max_block=8):
    """Largest divisor of `batch` such that (a) >= min_steps grid steps remain
    when possible (TensorCore sharding), (b) the per-step tiles stay inside the
    VMEM budget (double-buffered), (c) growth stops once the tile reaches
    ~target_bytes.  Prefers an even number of grid steps (v7x has 2 TCs)."""
    max_d = batch if batch < min_steps else batch // min_steps
    max_d = max(1, min(max_d, max_block))
    best = 1
    for d in range(1, max_d + 1):
        if batch % d:
            continue
        if 2 * d * per_batch_tile_bytes > vmem_budget:
            break
        best = d
        if d * per_batch_tile_bytes >= target_bytes:
            break
    steps = batch // best
    if steps > 1 and steps % 2 == 1:
        for d in range(best - 1, 0, -1):
            if batch % d == 0 and (batch // d) % 2 == 0:
                best = d
                break
    return best


def prop_forward(x, adj, w, b, *, gdep, alpha, block_b=None):
    """x: (B, c_in, N, L) NCHW; adj: (N, N); w: (c_out, c_in); b: (c_out,)."""
    B, C, N, L = x.shape
    O = w.shape[0]

    # Batch-invariant precompute hoisted out of the kernel.
    mm_dtype = jnp.bfloat16 if x.dtype == jnp.bfloat16 else jnp.float32
    m = _propagation_matrix(adj, gdep, alpha).astype(mm_dtype)
    w2 = w.reshape(O, C).astype(mm_dtype)
    b2 = b.reshape(O, 1).astype(jnp.float32)

    per_batch_tile_bytes = (C * N * L + O * N * L) * x.dtype.itemsize
    if block_b is None:
        block_b = _pick_block_b(B, per_batch_tile_bytes)
    assert B % block_b == 0, (B, block_b)

    out = pl.pallas_call(
        _prop_kernel,
        out_shape=jax.ShapeDtypeStruct((B, O, N * L), x.dtype),
        grid_spec=pltpu.PrefetchScalarGridSpec(
            num_scalar_prefetch=0,
            grid=(B // block_b,),
            in_specs=[
                pl.BlockSpec((N, N), lambda i: (0, 0)),                    # M (shared)
                pl.BlockSpec((O, C), lambda i: (0, 0)),                    # conv weight
                pl.BlockSpec((O, 1), lambda i: (0, 0)),                    # conv bias
                pl.BlockSpec((block_b, C, N, L), lambda i: (i, 0, 0, 0)),  # x per block
            ],
            out_specs=pl.BlockSpec((block_b, O, N * L), lambda i: (i, 0, 0)),
        ),
        compiler_params=pltpu.CompilerParams(
            dimension_semantics=("parallel",),
            vmem_limit_bytes=32 * 1024 * 1024,
        ),
    )(m, w2, b2, x)

    return out.reshape(B, O, N, L)


def prop_reference(x, adj, w, b, gdep, alpha):
    """Pure-JAX reference mirroring the PyTorch forward."""
    N = adj.shape[0]
    a = adj + jnp.eye(N, dtype=adj.dtype)
    a = a / a.sum(axis=1, keepdims=True)
    h = x
    for _ in range(gdep):
        h = alpha * x + (1.0 - alpha) * jnp.einsum('bcnl,nw->bcwl', h, a)
    return jnp.einsum('oc,bcnl->bonl', w, h) + b[None, :, None, None]


if __name__ == "__main__":
    key = jax.random.PRNGKey(0)
    k1, k2, k3, k4 = jax.random.split(key, 4)

    B, C_IN, C_OUT, N_NODES, L_SEQ = 2, 4, 8, 16, 16
    GDEP, ALPHA = 2, 0.05  # dropout is stored by the module but never applied in forward

    x = jax.random.normal(k1, (B, C_IN, N_NODES, L_SEQ), dtype=jnp.float32)
    adj = jax.random.uniform(k2, (N_NODES, N_NODES), dtype=jnp.float32)
    # deterministic synthetic Conv2d(c_in, c_out, 1, 1, bias=True) parameters
    w = 0.1 * jax.random.normal(k3, (C_OUT, C_IN), dtype=jnp.float32)
    b = 0.1 * jax.random.normal(k4, (C_OUT,), dtype=jnp.float32)

    out = prop_forward(x, adj, w, b, gdep=GDEP, alpha=ALPHA)
    out = jax.block_until_ready(out)

    ref = prop_reference(x, adj, w, b, GDEP, ALPHA)
    assert out.shape == (B, C_OUT, N_NODES, L_SEQ)
    err = float(jnp.max(jnp.abs(out - ref)))
    assert jnp.allclose(out, ref, atol=1e-4, rtol=1e-4), err

    print("KERNEL_OK")
</pallas_src>

<mosaic_0001>
module attributes {stable_mosaic.version = 11 : i64} {
  func.func @_prop_kernel(%arg0: i32, %arg1: memref<16x16xf32, #tpu.memory_space<vmem>>, %arg2: memref<8x4xf32, #tpu.memory_space<vmem>>, %arg3: memref<8x1xf32, #tpu.memory_space<vmem>>, %arg4: memref<1x4x16x16xf32, #tpu.memory_space<vmem>>, %arg5: memref<1x8x256xf32, #tpu.memory_space<vmem>>) attributes {dimension_semantics = [#tpu.dimension_semantics<parallel>], iteration_bounds = array<i64: 2>, scalar_prefetch = 0 : i64, scratch_operands = 0 : i64, tpu.core_type = #tpu.core_type<tc>, window_params = [{pipeline_mode = #tpu.pipeline_mode<synchronous>, transform_indices = @transform_0, window_bounds = array<i64: 16, 16>}, {pipeline_mode = #tpu.pipeline_mode<synchronous>, transform_indices = @transform_1, window_bounds = array<i64: 8, 4>}, {pipeline_mode = #tpu.pipeline_mode<synchronous>, transform_indices = @transform_2, window_bounds = array<i64: 8, 1>}, {transform_indices = @transform_3, window_bounds = array<i64: 1, 4, 16, 16>}, {transform_indices = @transform_4, window_bounds = array<i64: 1, 8, 256>}]} {
    %c0 = arith.constant 0 : index
    %c0_0 = arith.constant 0 : index
    %0 = vector.load %arg1[%c0, %c0_0] : memref<16x16xf32, #tpu.memory_space<vmem>>, vector<16x16xf32>
    %c0_1 = arith.constant 0 : index
    %c0_2 = arith.constant 0 : index
    %1 = vector.load %arg2[%c0_1, %c0_2] : memref<8x4xf32, #tpu.memory_space<vmem>>, vector<8x4xf32>
    %c0_3 = arith.constant 0 : index
    %c0_4 = arith.constant 0 : index
    %2 = vector.load %arg3[%c0_3, %c0_4] : memref<8x1xf32, #tpu.memory_space<vmem>>, vector<8x1xf32>
    %c0_5 = arith.constant 0 : index
    %c0_6 = arith.constant 0 : index
    %c0_7 = arith.constant 0 : index
    %c0_8 = arith.constant 0 : index
    %3 = vector.load %arg4[%c0_5, %c0_6, %c0_7, %c0_8] : memref<1x4x16x16xf32, #tpu.memory_space<vmem>>, vector<1x4x16x16xf32>
    %4 = vector.shape_cast %3 : vector<1x4x16x16xf32> to vector<4x16x16xf32>
    %5 = tpu.transpose %4, [1, 0, 2] : vector<4x16x16xf32> -> vector<16x4x16xf32>
    %6 = vector.shape_cast %5 : vector<16x4x16xf32> to vector<16x64xf32>
    %cst = arith.constant dense<0.000000e+00> : vector<16x64xf32>
    %7 = tpu.matmul %0, %6, %cst {dimension_numbers = #tpu.dot_dimension_numbers<[1], [0], [0], [1], [0, 0, 1, 1], [], []>} : vector<16x16xf32>, vector<16x64xf32>, vector<16x64xf32> -> vector<16x64xf32>
    %8 = vector.shape_cast %7 : vector<16x64xf32> to vector<16x4x16xf32>
    %9 = tpu.transpose %8, [1, 0, 2] : vector<16x4x16xf32> -> vector<4x16x16xf32>
    %10 = vector.shape_cast %9 : vector<4x16x16xf32> to vector<4x256xf32>
    %cst_9 = arith.constant dense<0.000000e+00> : vector<8x256xf32>
    %11 = tpu.matmul %1, %10, %cst_9 {dimension_numbers = #tpu.dot_dimension_numbers<[1], [0], [0], [1], [0, 0, 1, 1], [], []>} : vector<8x4xf32>, vector<4x256xf32>, vector<8x256xf32> -> vector<8x256xf32>
    %12 = vector.broadcast %2 : vector<8x1xf32> to vector<8x256xf32>
    %13 = arith.addf %11, %12 : vector<8x256xf32>
    %c0_10 = arith.constant 0 : index
    %c0_11 = arith.constant 0 : index
    %c0_12 = arith.constant 0 : index
    %14 = vector.load %arg5[%c0_10, %c0_11, %c0_12] : memref<1x8x256xf32, #tpu.memory_space<vmem>>, vector<1x8x256xf32>
    %15 = vector.shape_cast %14 : vector<1x8x256xf32> to vector<8x256xf32>
    %16 = vector.shape_cast %13 : vector<8x256xf32> to vector<1x8x256xf32>
    tpu.vector_store %arg5[%c0_10, %c0_11, %c0_12], %16 {strides = array<i32>} : memref<1x8x256xf32, #tpu.memory_space<vmem>>, vector<1x8x256xf32>,
    return
  }
  func.func @transform_0(%arg0: i32) -> (i32, i32) {
    %c0_i32 = arith.constant 0 : i32
    %c0_i32_0 = arith.constant 0 : i32
    %c0_i32_1 = arith.constant 0 : i32
    return %c0_i32, %c0_i32_0 : i32, i32
  }
  func.func @transform_1(%arg0: i32) -> (i32, i32) {
    %c0_i32 = arith.constant 0 : i32
    %c0_i32_0 = arith.constant 0 : i32
    %c0_i32_1 = arith.constant 0 : i32
    return %c0_i32, %c0_i32_0 : i32, i32
  }
  func.func @transform_2(%arg0: i32) -> (i32, i32) {
    %c0_i32 = arith.constant 0 : i32
    %c0_i32_0 = arith.constant 0 : i32
    %c0_i32_1 = arith.constant 0 : i32
    return %c0_i32, %c0_i32_0 : i32, i32
  }
  func.func @transform_3(%arg0: i32) -> (i32, i32, i32, i32) {
    %c0_i32 = arith.constant 0 : i32
    %c0_i32_0 = arith.constant 0 : i32
    %c0_i32_1 = arith.constant 0 : i32
    %c0_i32_2 = arith.constant 0 : i32
    return %arg0, %c0_i32, %c0_i32_0, %c0_i32_1 : i32, i32, i32, i32
  }
  func.func @transform_4(%arg0: i32) -> (i32, i32, i32) {
    %c0_i32 = arith.constant 0 : i32
    %c0_i32_0 = arith.constant 0 : i32
    %c0_i32_1 = arith.constant 0 : i32
    return %arg0, %c0_i32, %c0_i32_0 : i32, i32, i32
  }
}

</mosaic_0001>

<llo_original>
// kernel: tpu_custom_call.1
$region0: #{tpu_custom_call.1}
  #allocation0 [shape = 'u32[]', space=smem, size = 0x4, offset = 0x4, fixed_abs, tag = 'smem constant byte address 0x4 - core index']
  #allocation1 [shape = 'u32[144,128]{1,0:T(1,128)}', space=vmem, size = 0x12000, scoped, tag = 'internal scratch']
  %s0 = inlined_call_operand.vmem [shape: f32[16,16], index: 0, kind: input, shape index: {}]
  %s1 = inlined_call_operand.vmem [shape: f32[8,4], index: 1, kind: input, shape index: {}]
  %s2 = inlined_call_operand.vmem [shape: f32[8,1], index: 2, kind: input, shape index: {}]
  %s3 = inlined_call_operand.hbm [shape: f32[2,4,16,16], index: 3, kind: input, shape index: {}]
  %s4 = inlined_call_operand.hbm [shape: f32[2,8,256], index: 4, kind: output, shape index: {}]
  %s5 = sld [smem:[#allocation0]]
  $region53: #{tpu_custom_call.1} parent=0
    _
  %s7 = ssub.s32 1, %s5
  %s8 = scalar_select 0, %s7, %s5
  $region1: #{tpu_custom_call.1} parent=0
    #allocation2 [shape = 'u8[65536]{0}', space=vmem, size = 0x10000, scoped, tag = 'input window, operand 3']
    #allocation3 [shape = 's32[2]{0}', space=sflag, size = 0x8, scoped, tag = 'scoped memory for tpu_custom_call.1']
    #allocation4 [shape = 's32[2]{0}', space=sflag, size = 0x8, scoped, tag = 'scoped memory for tpu_custom_call.1']
    #allocation5 [shape = 'u8[16384]{0}', space=vmem, size = 0x4000, scoped, tag = 'output window, operand 0']
    %9 = vsyncpa [#allocation3], 0
    %s10 = scalar_lea.sflag [#allocation3], 1
    %11 = vsyncpa %s10, 0
    %12 = vsyncpa [#allocation4], 0
    %s13 = scalar_lea.sflag [#allocation4], 1
    %14 = vsyncpa %s13, 0
    loop: start=0, step=1, limit=4
    $region2: #{tpu_custom_call.1} parent=1 // loop_pre_header
      _
    $region3: #{tpu_custom_call.1} parent=1 // loop_header
      %s16 = sphi 0, %s20
      %p17 = scmp.ge.s32.totalorder %s16, 4
      %s24 = sphi 0, %s24
      %s26 = sphi 0, %s24
      %s27 = sphi 0, %s26
      %s41 = sphi 0, %s27
      %s45 = sphi 0, %s45
      %s47 = sphi 0, %s45
      %s48 = sphi 0, %s47
      %s62 = sphi 0, %s48
      %s66 = sphi 0, %s66
      %s68 = sphi 0, %s66
      %s69 = sphi 0, %s68
      %s83 = sphi 0, %s69
      %s89 = sphi 0, %s91
      %s92 = sphi 0, %s89
      %s93 = sphi 0, %s92
      %s109 = sphi 0, %s93
      %s115 = sphi 0, %s117
      %s118 = sphi 0, %s115
      %s119 = sphi 0, %s118
      %s135 = sphi 0, %s119
    $region4: #{tpu_custom_call.1} parent=1 // loop_header_branch
      %19 = sbr.rel (%p17) target = $region8
    $region5: #{tpu_custom_call.1} parent=1 // loop_body
      %s21 = ssub.s32 %s16, 1
      %s22 = ssub.s32 %s16, 2
      %s23 = sadd.s32 %s16, 1
      %s25 = sadd.s32 %s24, 1
      %p28 = scmp.eq.s32.totalorder %s16, 1
      %p29 = scmp.ne.s32.totalorder %s24, %s26
      %p30 = scmp.eq.s32.totalorder %s16, 0
      %p31 = por %p29, %p30
      %p32 = scmp.ne.s32.totalorder %s24, %s26
      %p33 = scmp.eq.s32.totalorder %s21, 1
      %p34 = por %p32, %p33
      %p35 = scmp.ne.s32.totalorder %s26, %s27
      %p36 = scmp.eq.s32.totalorder %s21, 0
      %p37 = por %p35, %p36
      %p38 = scmp.ne.s32.totalorder %s26, %s27
      %p39 = scmp.eq.s32.totalorder %s22, 1
      %p40 = por %p38, %p39
      %p42 = scmp.ne.s32.totalorder %s27, %s41
      %p43 = scmp.eq.s32.totalorder %s22, 0
      %p44 = por %p42, %p43
      %s46 = sadd.s32 %s45, 1
      %p49 = scmp.eq.s32.totalorder %s16, 1
      %p50 = scmp.ne.s32.totalorder %s45, %s47
      %p51 = scmp.eq.s32.totalorder %s16, 0
      %p52 = por %p50, %p51
      %p53 = scmp.ne.s32.totalorder %s45, %s47
      %p54 = scmp.eq.s32.totalorder %s21, 1
      %p55 = por %p53, %p54
      %p56 = scmp.ne.s32.totalorder %s47, %s48
      %p57 = scmp.eq.s32.totalorder %s21, 0
      %p58 = por %p56, %p57
      %p59 = scmp.ne.s32.totalorder %s47, %s48
      %p60 = scmp.eq.s32.totalorder %s22, 1
      %p61 = por %p59, %p60
      %p63 = scmp.ne.s32.totalorder %s48, %s62
      %p64 = scmp.eq.s32.totalorder %s22, 0
      %p65 = por %p63, %p64
      %s67 = sadd.s32 %s66, 1
      %p70 = scmp.eq.s32.totalorder %s16, 1
      %p71 = scmp.ne.s32.totalorder %s66, %s68
      %p72 = scmp.eq.s32.totalorder %s16, 0
      %p73 = por %p71, %p72
      %p74 = scmp.ne.s32.totalorder %s66, %s68
      %p75 = scmp.eq.s32.totalorder %s21, 1
      %p76 = por %p74, %p75
      %p77 = scmp.ne.s32.totalorder %s68, %s69
      %p78 = scmp.eq.s32.totalorder %s21, 0
      %p79 = por %p77, %p78
      %p80 = scmp.ne.s32.totalorder %s68, %s69
      %p81 = scmp.eq.s32.totalorder %s22, 1
      %p82 = por %p80, %p81
      %p84 = scmp.ne.s32.totalorder %s69, %s83
      %p85 = scmp.eq.s32.totalorder %s22, 0
      %p86 = por %p84, %p85
      %s87 = ssub.s32 %s16, %s23
      %p88 = scmp.eq.s32.totalorder %s87, 0
      %s90 = sadd.s32 %s89, 1
      %s91 = scalar_select %p88, %s89, %s90
      %p94 = pneg %p88
      %p95 = scmp.eq.s32.totalorder %s16, 1
      %p96 = por %p94, %p95
      %p97 = scmp.ne.s32.totalorder %s89, %s92
      %p98 = scmp.eq.s32.totalorder %s16, 0
      %p99 = por %p97, %p98
      %p100 = scmp.ne.s32.totalorder %s89, %s92
      %p101 = scmp.eq.s32.totalorder %s21, 1
      %p102 = por %p100, %p101
      %p103 = scmp.ne.s32.totalorder %s92, %s93
      %p104 = scmp.eq.s32.totalorder %s21, 0
      %p105 = por %p103, %p104
      %p106 = scmp.ne.s32.totalorder %s92, %s93
      %p107 = scmp.eq.s32.totalorder %s22, 1
      %p108 = por %p106, %p107
      %p110 = scmp.ne.s32.totalorder %s93, %s109
      %p111 = scmp.eq.s32.totalorder %s22, 0
      %p112 = por %p110, %p111
      %s113 = ssub.s32 %s16, %s23
      %p114 = scmp.eq.s32.totalorder %s113, 0
      %s116 = sadd.s32 %s115, 1
      %s117 = scalar_select %p114, %s115, %s116
      %p120 = pneg %p114
      %p121 = scmp.eq.s32.totalorder %s16, 1
      %p122 = por %p120, %p121
      %p123 = scmp.ne.s32.totalorder %s115, %s118
      %p124 = scmp.eq.s32.totalorder %s16, 0
      %p125 = por %p123, %p124
      %p126 = scmp.ne.s32.totalorder %s115, %s118
      %p127 = scmp.eq.s32.totalorder %s21, 1
      %p128 = por %p126, %p127
      %p129 = scmp.ne.s32.totalorder %s118, %s119
      %p130 = scmp.eq.s32.totalorder %s21, 0
      %p131 = por %p129, %p130
      %p132 = scmp.ne.s32.totalorder %s118, %s119
      %p133 = scmp.eq.s32.totalorder %s22, 1
      %p134 = por %p132, %p133
      %p136 = scmp.ne.s32.totalorder %s119, %s135
      %p137 = scmp.eq.s32.totalorder %s22, 0
      %p138 = por %p136, %p137
      %p139 = scmp.le.s32.totalorder 1, %s16
      %p140 = scmp.lt.s32.totalorder %s16, 3
      %p141 = pnand %p139, %p140
      %p142 = pneg %p141
      // Predicated region
      $region9: #{tpu_custom_call.1} parent=5 // pred_check
        _
      $region10: #{tpu_custom_call.1} parent=5 // pred_check_branch
        %144 = sbr.rel (%p141) target = $region12
      $region11: #{tpu_custom_call.1} parent=5 // pred_region
        %s145 = ssub.s32 %s16, 1
        // Predicated region
        $region13: #{tpu_custom_call.1} parent=11 // pred_check
          %p146 = pneg %p37
        $region14: #{tpu_custom_call.1} parent=11 // pred_check_branch
          %148 = sbr.rel (%p146) target = $region16
        $region15: #{tpu_custom_call.1} parent=11 // pred_region
          _
        $region16: #{tpu_custom_call.1} parent=11 // pred_fallthru
          _
        // Predicated region
        $region17: #{tpu_custom_call.1} parent=11 // pred_check
          %p149 = pneg %p58
        $region18: #{tpu_custom_call.1} parent=11 // pred_check_branch
          %151 = sbr.rel (%p149) target = $region20
        $region19: #{tpu_custom_call.1} parent=11 // pred_region
          _
        $region20: #{tpu_custom_call.1} parent=11 // pred_fallthru
          _
        // Predicated region
        $region21: #{tpu_custom_call.1} parent=11 // pred_check
          %p152 = pneg %p79
        $region22: #{tpu_custom_call.1} parent=11 // pred_check_branch
          %154 = sbr.rel (%p152) target = $region24
        $region23: #{tpu_custom_call.1} parent=11 // pred_region
          _
        $region24: #{tpu_custom_call.1} parent=11 // pred_fallthru
          _
      $region12: #{tpu_custom_call.1} parent=5 // pred_fallthru
        _
      %p155 = scmp.lt.s32.totalorder %s16, 2
      // Predicated region
      $region25: #{tpu_custom_call.1} parent=5 // pred_check
        %p156 = pneg %p155
      $region26: #{tpu_custom_call.1} parent=5 // pred_check_branch
        %158 = sbr.rel (%p156) target = $region28
      $region27: #{tpu_custom_call.1} parent=5 // pred_region
        // Predicated region
        $region29: #{tpu_custom_call.1} parent=27 // pred_check
          %p159 = pneg %p99
        $region30: #{tpu_custom_call.1} parent=27 // pred_check_branch
          %161 = sbr.rel (%p159) target = $region32
        $region31: #{tpu_custom_call.1} parent=27 // pred_region
          %s162 = sand.u32 %s89, 1
          %s163 = scalar_lea.sflag [#allocation3], %s162
          %s164 = sand.u32 %s89, 1
          %s165 = smul.addr %s164, 64
          %s166 = scalar_lea.vmem [#allocation2], %s165
          %s168 = ssub.s32 1024, 1024
          %169 = vsyncadd %s163, %s168
          %s170 = smul.addr %s16, 8
          %s171 = smul.addr %s170, 128
          %s172 = scalar_lea.hbm %s3, %s171
          %s173 = sshll.u32 %s166, 4
          %s174 = int_to_ptr.vmem [resolvable:$true] %s173
          %179 = dma.hbm_to_vmem [thread:$0]  %s172, 1024, %s174, %s163, 128, 128, 8
        $region32: #{tpu_custom_call.1} parent=27 // pred_fallthru
          _
      $region28: #{tpu_custom_call.1} parent=5 // pred_fallthru
        _
      %p180 = scmp.le.s32.totalorder 1, %s16
      %p181 = scmp.lt.s32.totalorder %s16, 3
      %p182 = pnand %p180, %p181
      %p183 = pneg %p182
      // Predicated region
      $region33: #{tpu_custom_call.1} parent=5 // pred_check
        _
      $region34: #{tpu_custom_call.1} parent=5 // pred_check_branch
        %185 = sbr.rel (%p182) target = $region36
      $region35: #{tpu_custom_call.1} parent=5 // pred_region
        %s186 = ssub.s32 %s16, 1
        %s187 = sand.u32 %s92, 1
        %s188 = scalar_lea.sflag [#allocation3], %s187
        %s189 = sand.u32 %s92, 1
        %s190 = smul.addr %s189, 64
        %s191 = scalar_lea.vmem [#allocation2], %s190
        // Predicated region
        $region37: #{tpu_custom_call.1} parent=35 // pred_check
          %p192 = pneg %p105
        $region38: #{tpu_custom_call.1} parent=35 // pred_check_branch
          %194 = sbr.rel (%p192) target = $region40
        $region39: #{tpu_custom_call.1} parent=35 // pred_region
          %195 = dma.done %s188, 1024
        $region40: #{tpu_custom_call.1} parent=35 // pred_fallthru
          _
        %p196 = pneg %p37
        %p197 = pneg %p34
        %p198 = pneg %p58
        %p199 = pneg %p55
        %p200 = pneg %p79
        %p201 = pneg %p76
        %s202 = sand.u32 %s92, 1
        %s203 = scalar_lea.sflag [#allocation3], %s202
        %s204 = sand.u32 %s92, 1
        %s205 = smul.addr %s204, 64
        %s206 = scalar_lea.vmem [#allocation2], %s205
        %p207 = pneg %p105
        %p208 = pneg %p102
        %p209 = pneg %p131
        %p210 = pneg %p128
        %s211 = sand.u32 %s118, 1
        %s212 = scalar_lea.sflag [#allocation4], %s211
        %s213 = sand.u32 %s118, 1
        %s214 = smul.addr %s213, 16
        %s215 = scalar_lea.vmem [#allocation5], %s214
        %v216 = vld [vmem:[%s0] sm:$0xff]
        %v217 = vld [vmem:[%s0 + $0x8] sm:$0xff]
        %v218 = vld [vmem:[%s1] sm:$0xff]
        %v219 = vld [vmem:[%s2] sm:$0xff]
        %v220 = vld [vmem:[%s191] sm:$0xff]
        %v221 = vld [vmem:[%s191 + $0x8] sm:$0xff]
        %v222 = vld [vmem:[%s191 + $0x10] sm:$0xff]
        %v223 = vld [vmem:[%s191 + $0x18] sm:$0xff]
        %v224 = vld [vmem:[%s191 + $0x20] sm:$0xff]
        %v225 = vld [vmem:[%s191 + $0x28] sm:$0xff]
        %v226 = vld [vmem:[%s191 + $0x30] sm:$0xff]
        %v227 = vld [vmem:[%s191 + $0x38] sm:$0xff]
        %v228 = vcombine.low %v220, %v224
        %v229 = vcombine.high %v220, %v224
        %v231 = vunpack.c.l.s4 1983009808
        %v232 = vunpack.c.0.s8 %v231
        %v233 = vlaneseq
        %v234 = vshrl.u32 %v233, 7
        %v235 = vsub.s32 %v232, %v234
        %v236 = vrot.slane %v228, %v235
        %v238 = vunpack.c.l.s4 1983009808
        %v239 = vunpack.c.0.s8 %v238
        %v240 = vlaneseq
        %v241 = vshrl.u32 %v240, 7
        %v242 = vsub.s32 %v239, %v241
        %v243 = vrot.slane %v229, %v242
        %v244 = vcombine.low %v222, %v226
        %v245 = vcombine.high %v222, %v226
        %v247 = vunpack.c.l.s4 1983009808
        %v248 = vunpack.c.0.s8 %v247
        %v249 = vlaneseq
        %v250 = vshrl.u32 %v249, 7
        %v251 = vsub.s32 %v248, %v250
        %v252 = vrot.slane %v244, %v251
        %v254 = vunpack.c.l.s4 1983009808
        %v255 = vunpack.c.0.s8 %v254
        %v256 = vlaneseq
        %v257 = vshrl.u32 %v256, 7
        %v258 = vsub.s32 %v255, %v257
        %v259 = vrot.slane %v245, %v258
        %v260 = vcombine.low %v236, %v252
        %v261 = vcombine.high %v236, %v252
        %v263 = vunpack.c.l.s4 1934713408
        %v264 = vunpack.c.0.s8 %v263
        %v265 = vlaneseq
        %v266 = vshrl.u32 %v265, 7
        %v267 = vsub.s32 %v264, %v266
        %v268 = vrot.slane %v260, %v267
        %v270 = vunpack.c.l.s4 1934713408
        %v271 = vunpack.c.0.s8 %v270
        %v272 = vlaneseq
        %v273 = vshrl.u32 %v272, 7
        %v274 = vsub.s32 %v271, %v273
        %v275 = vrot.slane %v261, %v274
        %v276 = vcombine.low %v243, %v259
        %v277 = vcombine.high %v243, %v259
        %v279 = vunpack.c.l.s4 1934713408
        %v280 = vunpack.c.0.s8 %v279
        %v281 = vlaneseq
        %v282 = vshrl.u32 %v281, 7
        %v283 = vsub.s32 %v280, %v282
        %v284 = vrot.slane %v276, %v283
        %v286 = vunpack.c.l.s4 1934713408
        %v287 = vunpack.c.0.s8 %v286
        %v288 = vlaneseq
        %v289 = vshrl.u32 %v288, 7
        %v290 = vsub.s32 %v287, %v289
        %v291 = vrot.slane %v277, %v290
        %v292 = vcombine.high %v268, 0.0
        %v293 = vcombine.high %v275, 0.0
        %v294 = vcombine.high %v284, 0.0
        %v295 = vcombine.high %v291, 0.0
        %v296 = vcombine.low %v221, %v225
        %v297 = vcombine.high %v221, %v225
        %v299 = vunpack.c.l.s4 1983009808
        %v300 = vunpack.c.0.s8 %v299
        %v301 = vlaneseq
        %v302 = vshrl.u32 %v301, 7
        %v303 = vsub.s32 %v300, %v302
        %v304 = vrot.slane %v296, %v303
        %v306 = vunpack.c.l.s4 1983009808
        %v307 = vunpack.c.0.s8 %v306
        %v308 = vlaneseq
        %v309 = vshrl.u32 %v308, 7
        %v310 = vsub.s32 %v307, %v309
        %v311 = vrot.slane %v297, %v310
        %v312 = vcombine.low %v223, %v227
        %v313 = vcombine.high %v223, %v227
        %v315 = vunpack.c.l.s4 1983009808
        %v316 = vunpack.c.0.s8 %v315
        %v317 = vlaneseq
        %v318 = vshrl.u32 %v317, 7
        %v319 = vsub.s32 %v316, %v318
        %v320 = vrot.slane %v312, %v319
        %v322 = vunpack.c.l.s4 1983009808
        %v323 = vunpack.c.0.s8 %v322
        %v324 = vlaneseq
        %v325 = vshrl.u32 %v324, 7
        %v326 = vsub.s32 %v323, %v325
        %v327 = vrot.slane %v313, %v326
        %v328 = vcombine.low %v304, %v320
        %v329 = vcombine.high %v304, %v320
        %v331 = vunpack.c.l.s4 1934713408
        %v332 = vunpack.c.0.s8 %v331
        %v333 = vlaneseq
        %v334 = vshrl.u32 %v333, 7
        %v335 = vsub.s32 %v332, %v334
        %v336 = vrot.slane %v328, %v335
        %v338 = vunpack.c.l.s4 1934713408
        %v339 = vunpack.c.0.s8 %v338
        %v340 = vlaneseq
        %v341 = vshrl.u32 %v340, 7
        %v342 = vsub.s32 %v339, %v341
        %v343 = vrot.slane %v329, %v342
        %v344 = vcombine.low %v311, %v327
        %v345 = vcombine.high %v311, %v327
        %v347 = vunpack.c.l.s4 1934713408
        %v348 = vunpack.c.0.s8 %v347
        %v349 = vlaneseq
        %v350 = vshrl.u32 %v349, 7
        %v351 = vsub.s32 %v348, %v350
        %v352 = vrot.slane %v344, %v351
        %v354 = vunpack.c.l.s4 1934713408
        %v355 = vunpack.c.0.s8 %v354
        %v356 = vlaneseq
        %v357 = vshrl.u32 %v356, 7
        %v358 = vsub.s32 %v355, %v357
        %v359 = vrot.slane %v345, %v358
        %v360 = vcombine.high %v336, 0.0
        %v361 = vcombine.high %v343, 0.0
        %v362 = vcombine.high %v352, 0.0
        %v363 = vcombine.high %v359, 0.0
        %v364 = vcombine.low %v268, %v275
        %v366 = vunpack.c.l.s4 1983009808
        %v367 = vunpack.c.0.s8 %v366
        %v368 = vlaneseq
        %v369 = vshrl.u32 %v368, 7
        %v370 = vsub.s32 %v367, %v369
        %v371 = vrot.slane %v364, %v370
        %v372 = vcombine.low %v292, %v293
        %v374 = vunpack.c.l.s4 1983009808
        %v375 = vunpack.c.0.s8 %v374
        %v376 = vlaneseq
        %v377 = vshrl.u32 %v376, 7
        %v378 = vsub.s32 %v375, %v377
        %v379 = vrot.slane %v372, %v378
        %v380 = vcombine.low %v284, %v291
        %v382 = vunpack.c.l.s4 1983009808
        %v383 = vunpack.c.0.s8 %v382
        %v384 = vlaneseq
        %v385 = vshrl.u32 %v384, 7
        %v386 = vsub.s32 %v383, %v385
        %v387 = vrot.slane %v380, %v386
        %v388 = vcombine.low %v294, %v295
        %v390 = vunpack.c.l.s4 1983009808
        %v391 = vunpack.c.0.s8 %v390
        %v392 = vlaneseq
        %v393 = vshrl.u32 %v392, 7
        %v394 = vsub.s32 %v391, %v393
        %v395 = vrot.slane %v388, %v394
        %v396 = vcombine.low %v371, %v379
        %v397 = vcombine.high %v371, %v379
        %v399 = vunpack.c.l.s4 1934713408
        %v400 = vunpack.c.0.s8 %v399
        %v401 = vlaneseq
        %v402 = vshrl.u32 %v401, 7
        %v403 = vsub.s32 %v400, %v402
        %v404 = vrot.slane %v396, %v403
        %v406 = vunpack.c.l.s4 1934713408
        %v407 = vunpack.c.0.s8 %v406
        %v408 = vlaneseq
        %v409 = vshrl.u32 %v408, 7
        %v410 = vsub.s32 %v407, %v409
        %v411 = vrot.slane %v397, %v410
        %v412 = vcombine.low %v387, %v395
        %v413 = vcombine.high %v387, %v395
        %v415 = vunpack.c.l.s4 1934713408
        %v416 = vunpack.c.0.s8 %v415
        %v417 = vlaneseq
        %v418 = vshrl.u32 %v417, 7
        %v419 = vsub.s32 %v416, %v418
        %v420 = vrot.slane %v412, %v419
        %v422 = vunpack.c.l.s4 1934713408
        %v423 = vunpack.c.0.s8 %v422
        %v424 = vlaneseq
        %v425 = vshrl.u32 %v424, 7
        %v426 = vsub.s32 %v423, %v425
        %v427 = vrot.slane %v413, %v426
        %v428 = vcombine.low %v404, %v420
        %v429 = vcombine.high %v404, %v420
        %v430 = vcombine.low %v411, %v427
        %v431 = vcombine.high %v411, %v427
        %v432 = vcombine.low %v336, %v343
        %v434 = vunpack.c.l.s4 1983009808
        %v435 = vunpack.c.0.s8 %v434
        %v436 = vlaneseq
        %v437 = vshrl.u32 %v436, 7
        %v438 = vsub.s32 %v435, %v437
        %v439 = vrot.slane %v432, %v438
        %v440 = vcombine.low %v360, %v361
        %v442 = vunpack.c.l.s4 1983009808
        %v443 = vunpack.c.0.s8 %v442
        %v444 = vlaneseq
        %v445 = vshrl.u32 %v444, 7
        %v446 = vsub.s32 %v443, %v445
        %v447 = vrot.slane %v440, %v446
        %v448 = vcombine.low %v352, %v359
        %v450 = vunpack.c.l.s4 1983009808
        %v451 = vunpack.c.0.s8 %v450
        %v452 = vlaneseq
        %v453 = vshrl.u32 %v452, 7
        %v454 = vsub.s32 %v451, %v453
        %v455 = vrot.slane %v448, %v454
        %v456 = vcombine.low %v362, %v363
        %v458 = vunpack.c.l.s4 1983009808
        %v459 = vunpack.c.0.s8 %v458
        %v460 = vlaneseq
        %v461 = vshrl.u32 %v460, 7
        %v462 = vsub.s32 %v459, %v461
        %v463 = vrot.slane %v456, %v462
        %v464 = vcombine.low %v439, %v447
        %v465 = vcombine.high %v439, %v447
        %v467 = vunpack.c.l.s4 1934713408
        %v468 = vunpack.c.0.s8 %v467
        %v469 = vlaneseq
        %v470 = vshrl.u32 %v469, 7
        %v471 = vsub.s32 %v468, %v470
        %v472 = vrot.slane %v464, %v471
        %v474 = vunpack.c.l.s4 1934713408
        %v475 = vunpack.c.0.s8 %v474
        %v476 = vlaneseq
        %v477 = vshrl.u32 %v476, 7
        %v478 = vsub.s32 %v475, %v477
        %v479 = vrot.slane %v465, %v478
        %v480 = vcombine.low %v455, %v463
        %v481 = vcombine.high %v455, %v463
        %v483 = vunpack.c.l.s4 1934713408
        %v484 = vunpack.c.0.s8 %v483
        %v485 = vlaneseq
        %v486 = vshrl.u32 %v485, 7
        %v487 = vsub.s32 %v484, %v486
        %v488 = vrot.slane %v480, %v487
        %v490 = vunpack.c.l.s4 1934713408
        %v491 = vunpack.c.0.s8 %v490
        %v492 = vlaneseq
        %v493 = vshrl.u32 %v492, 7
        %v494 = vsub.s32 %v491, %v493
        %v495 = vrot.slane %v481, %v494
        %v496 = vcombine.low %v472, %v488
        %v497 = vcombine.high %v472, %v488
        %v498 = vcombine.low %v479, %v495
        %v499 = vcombine.high %v479, %v495
        %502 = vrot.lane.b32.xlu0 %v429, 16
        %v503 = vpop.permute.xlu0 %502
        %504 = vrot.lane.b32.xlu0 %v497, 16
        %v505 = vpop.permute.xlu0 %504
        %510 = vrot.lane.b32.xlu0 %v430, 32
        %v511 = vpop.permute.xlu0 %510
        %512 = vrot.lane.b32.xlu0 %v498, 32
        %v513 = vpop.permute.xlu0 %512
        %518 = vrot.lane.b32.xlu0 %v431, 48
        %v519 = vpop.permute.xlu0 %518
        %520 = vrot.lane.b32.xlu0 %v499, 48
        %v521 = vpop.permute.xlu0 %520
        %vm524 = vcmask 130048
        %v525 = vsel %vm524, %v428, %v503
        %v526 = vsel %vm524, %v496, %v505
        %vm527 = vcmask 261120
        %v528 = vsel %vm527, %v525, %v511
        %v529 = vsel %vm527, %v526, %v513
        %vm530 = vcmask 392192
        %v531 = vsel %vm530, %v528, %v519
        %v532 = vsel %vm530, %v529, %v521
        %v534 = vsel %vm524, %v216, 0
        %v537 = vsel %vm524, %v217, 0
        %539 = vmatprep.subr.mxu0 0.0
        %540 = vmatpush1.msra.mxu0 %v531
        %541 = vmatprep.subr.mxu0 0.0
        %542 = vmatpush1.msra.mxu0 %v532
        %543 = vmatprep.subr.mxu0 0.0
        %544 = vmatpush1.msra.mxu0 0.0
        %545 = vmatprep.subr.mxu0 0.0
        %546 = vmatpush1.msra.mxu0 0.0
        %547 = vmatprep.subr.mxu0 0.0
        %548 = vmatpush1.msra.mxu0 0.0
        %549 = vmatprep.subr.mxu0 0.0
        %550 = vmatpush1.msra.mxu0 0.0
        %551 = vmatprep.subr.mxu0 0.0
        %552 = vmatpush1.msra.mxu0 0.0
        %553 = vmatprep.subr.mxu0 0.0
        %554 = vmatpush1.msra.mxu0 0.0
        %555 = vmatprep.subr.mxu0 0.0
        %556 = vmatpush1.msra.mxu0 0.0
        %557 = vmatprep.subr.mxu0 0.0
        %558 = vmatpush1.msra.mxu0 0.0
        %559 = vmatprep.subr.mxu0 0.0
        %560 = vmatpush1.msra.mxu0 0.0
        %561 = vmatprep.subr.mxu0 0.0
        %562 = vmatpush1.msra.mxu0 0.0
        %563 = vmatprep.subr.mxu0 0.0
        %564 = vmatpush1.msra.mxu0 0.0
        %565 = vmatprep.subr.mxu0 0.0
        %566 = vmatpush1.msra.mxu0 0.0
        %567 = vmatprep.subr.mxu0 0.0
        %568 = vmatpush1.msra.mxu0 0.0
        %569 = vmatprep.subr.mxu0 0.0
        %570 = vmatpush1.msra.mxu0 0.0
        %571 = vmatprep.subr.mxu0 0.0
        %572 = vmatpush1.msra.mxu0 0.0
        %573 = vmatprep.subr.mxu0 0.0
        %574 = vmatpush1.msra.mxu0 0.0
        %575 = vmatprep.subr.mxu0 0.0
        %576 = vmatpush1.msra.mxu0 0.0
        %577 = vmatprep.subr.mxu0 0.0
        %578 = vmatpush1.msra.mxu0 0.0
        %579 = vmatprep.subr.mxu0 0.0
        %580 = vmatpush1.msra.mxu0 0.0
        %581 = vmatprep.subr.mxu0 0.0
        %582 = vmatpush1.msra.mxu0 0.0
        %583 = vmatprep.subr.mxu0 0.0
        %584 = vmatpush1.msra.mxu0 0.0
        %585 = vmatprep.subr.mxu0 0.0
        %586 = vmatpush1.msra.mxu0 0.0
        %587 = vmatprep.subr.mxu0 0.0
        %588 = vmatpush1.msra.mxu0 0.0
        %589 = vmatprep.subr.mxu0 0.0
        %590 = vmatpush1.msra.mxu0 0.0
        %591 = vmatprep.subr.mxu0 0.0
        %592 = vmatpush1.msra.mxu0 0.0
        %593 = vmatprep.subr.mxu0 0.0
        %594 = vmatpush1.msra.mxu0 0.0
        %595 = vmatprep.subr.mxu0 0.0
        %596 = vmatpush1.msra.mxu0 0.0
        %597 = vmatprep.subr.mxu0 0.0
        %598 = vmatpush1.msra.mxu0 0.0
        %599 = vmatprep.subr.mxu0 0.0
        %600 = vmatpush1.msra.mxu0 0.0
        %601 = vmatprep.subr.mxu0 0.0
        %602 = vmatpush1.msra.mxu0 0.0
        %603 = vmatprep.mubr.f32.mxu0 0.0
        %604 = vmatmul.mubr.f32.gmra.mrb[0].mxu0 %v534
        %v605 = vpop.f32.mrb[0].mxu0
        %v606 = vadd.f32 0.0, %v605
        %v607 = vpop.f32.mrb[0].mxu0
        %608 = vmatprep.mubr.f32.mxu0 0.0
        %609 = vmatmul.mubr.f32.gmra.mrb[0].mxu0 %v537
        %v610 = vpop.f32.mrb[0].mxu0
        %v611 = vadd.f32 0.0, %v610
        %v612 = vpop.f32.mrb[0].mxu0
        %613 = vdwg.mxu0
        %616 = vrot.lane.b32.xlu0 %v606, 112
        %v617 = vpop.permute.xlu0 %616
        %618 = vrot.lane.b32.xlu0 %v611, 112
        %v619 = vpop.permute.xlu0 %618
        %622 = vrot.lane.b32.xlu0 %v606, 96
        %v623 = vpop.permute.xlu0 %622
        %624 = vrot.lane.b32.xlu0 %v611, 96
        %v625 = vpop.permute.xlu0 %624
        %628 = vrot.lane.b32.xlu0 %v606, 80
        %v629 = vpop.permute.xlu0 %628
        %630 = vrot.lane.b32.xlu0 %v611, 80
        %v631 = vpop.permute.xlu0 %630
        %v634 = vcombine.low %v606, %v623
        %v635 = vcombine.high %v606, %v623
        %v637 = vunpack.c.l.s4 1983009808
        %v638 = vunpack.c.0.s8 %v637
        %v639 = vlaneseq
        %v640 = vshrl.u32 %v639, 7
        %v641 = vsub.s32 %v638, %v640
        %v642 = vrot.slane %v634, %v641
        %v644 = vunpack.c.l.s4 1983009808
        %v645 = vunpack.c.0.s8 %v644
        %v646 = vlaneseq
        %v647 = vshrl.u32 %v646, 7
        %v648 = vsub.s32 %v645, %v647
        %v649 = vrot.slane %v635, %v648
        %v650 = vcombine.low %v617, %v629
        %v651 = vcombine.high %v617, %v629
        %v653 = vunpack.c.l.s4 1983009808
        %v654 = vunpack.c.0.s8 %v653
        %v655 = vlaneseq
        %v656 = vshrl.u32 %v655, 7
        %v657 = vsub.s32 %v654, %v656
        %v658 = vrot.slane %v650, %v657
        %v660 = vunpack.c.l.s4 1983009808
        %v661 = vunpack.c.0.s8 %v660
        %v662 = vlaneseq
        %v663 = vshrl.u32 %v662, 7
        %v664 = vsub.s32 %v661, %v663
        %v665 = vrot.slane %v651, %v664
        %v666 = vcombine.low %v642, %v658
        %v667 = vcombine.high %v642, %v658
        %v669 = vunpack.c.l.s4 1934713408
        %v670 = vunpack.c.0.s8 %v669
        %v671 = vlaneseq
        %v672 = vshrl.u32 %v671, 7
        %v673 = vsub.s32 %v670, %v672
        %v674 = vrot.slane %v666, %v673
        %v676 = vunpack.c.l.s4 1934713408
        %v677 = vunpack.c.0.s8 %v676
        %v678 = vlaneseq
        %v679 = vshrl.u32 %v678, 7
        %v680 = vsub.s32 %v677, %v679
        %v681 = vrot.slane %v667, %v680
        %v682 = vcombine.low %v649, %v665
        %v683 = vcombine.high %v649, %v665
        %v685 = vunpack.c.l.s4 1934713408
        %v686 = vunpack.c.0.s8 %v685
        %v687 = vlaneseq
        %v688 = vshrl.u32 %v687, 7
        %v689 = vsub.s32 %v686, %v688
        %v690 = vrot.slane %v682, %v689
        %v692 = vunpack.c.l.s4 1934713408
        %v693 = vunpack.c.0.s8 %v692
        %v694 = vlaneseq
        %v695 = vshrl.u32 %v694, 7
        %v696 = vsub.s32 %v693, %v695
        %v697 = vrot.slane %v683, %v696
        %v698 = vcombine.high %v674, 0.0
        %v699 = vcombine.high %v681, 0.0
        %v700 = vcombine.high %v690, 0.0
        %v701 = vcombine.high %v697, 0.0
        %v702 = vcombine.low %v611, %v625
        %v703 = vcombine.high %v611, %v625
        %v705 = vunpack.c.l.s4 1983009808
        %v706 = vunpack.c.0.s8 %v705
        %v707 = vlaneseq
        %v708 = vshrl.u32 %v707, 7
        %v709 = vsub.s32 %v706, %v708
        %v710 = vrot.slane %v702, %v709
        %v712 = vunpack.c.l.s4 1983009808
        %v713 = vunpack.c.0.s8 %v712
        %v714 = vlaneseq
        %v715 = vshrl.u32 %v714, 7
        %v716 = vsub.s32 %v713, %v715
        %v717 = vrot.slane %v703, %v716
        %v718 = vcombine.low %v619, %v631
        %v719 = vcombine.high %v619, %v631
        %v721 = vunpack.c.l.s4 1983009808
        %v722 = vunpack.c.0.s8 %v721
        %v723 = vlaneseq
        %v724 = vshrl.u32 %v723, 7
        %v725 = vsub.s32 %v722, %v724
        %v726 = vrot.slane %v718, %v725
        %v728 = vunpack.c.l.s4 1983009808
        %v729 = vunpack.c.0.s8 %v728
        %v730 = vlaneseq
        %v731 = vshrl.u32 %v730, 7
        %v732 = vsub.s32 %v729, %v731
        %v733 = vrot.slane %v719, %v732
        %v734 = vcombine.low %v710, %v726
        %v735 = vcombine.high %v710, %v726
        %v737 = vunpack.c.l.s4 1934713408
        %v738 = vunpack.c.0.s8 %v737
        %v739 = vlaneseq
        %v740 = vshrl.u32 %v739, 7
        %v741 = vsub.s32 %v738, %v740
        %v742 = vrot.slane %v734, %v741
        %v744 = vunpack.c.l.s4 1934713408
        %v745 = vunpack.c.0.s8 %v744
        %v746 = vlaneseq
        %v747 = vshrl.u32 %v746, 7
        %v748 = vsub.s32 %v745, %v747
        %v749 = vrot.slane %v735, %v748
        %v750 = vcombine.low %v717, %v733
        %v751 = vcombine.high %v717, %v733
        %v753 = vunpack.c.l.s4 1934713408
        %v754 = vunpack.c.0.s8 %v753
        %v755 = vlaneseq
        %v756 = vshrl.u32 %v755, 7
        %v757 = vsub.s32 %v754, %v756
        %v758 = vrot.slane %v750, %v757
        %v760 = vunpack.c.l.s4 1934713408
        %v761 = vunpack.c.0.s8 %v760
        %v762 = vlaneseq
        %v763 = vshrl.u32 %v762, 7
        %v764 = vsub.s32 %v761, %v763
        %v765 = vrot.slane %v751, %v764
        %v766 = vcombine.high %v742, 0.0
        %v767 = vcombine.high %v749, 0.0
        %v768 = vcombine.high %v758, 0.0
        %v769 = vcombine.high %v765, 0.0
        %v770 = vcombine.low %v674, %v681
        %v772 = vunpack.c.l.s4 1983009808
        %v773 = vunpack.c.0.s8 %v772
        %v774 = vlaneseq
        %v775 = vshrl.u32 %v774, 7
        %v776 = vsub.s32 %v773, %v775
        %v777 = vrot.slane %v770, %v776
        %v778 = vcombine.low %v698, %v699
        %v780 = vunpack.c.l.s4 1983009808
        %v781 = vunpack.c.0.s8 %v780
        %v782 = vlaneseq
        %v783 = vshrl.u32 %v782, 7
        %v784 = vsub.s32 %v781, %v783
        %v785 = vrot.slane %v778, %v784
        %v786 = vcombine.low %v690, %v697
        %v788 = vunpack.c.l.s4 1983009808
        %v789 = vunpack.c.0.s8 %v788
        %v790 = vlaneseq
        %v791 = vshrl.u32 %v790, 7
        %v792 = vsub.s32 %v789, %v791
        %v793 = vrot.slane %v786, %v792
        %v794 = vcombine.low %v700, %v701
        %v796 = vunpack.c.l.s4 1983009808
        %v797 = vunpack.c.0.s8 %v796
        %v798 = vlaneseq
        %v799 = vshrl.u32 %v798, 7
        %v800 = vsub.s32 %v797, %v799
        %v801 = vrot.slane %v794, %v800
        %v802 = vcombine.low %v777, %v785
        %v803 = vcombine.high %v777, %v785
        %v805 = vunpack.c.l.s4 1934713408
        %v806 = vunpack.c.0.s8 %v805
        %v807 = vlaneseq
        %v808 = vshrl.u32 %v807, 7
        %v809 = vsub.s32 %v806, %v808
        %v810 = vrot.slane %v802, %v809
        %v812 = vunpack.c.l.s4 1934713408
        %v813 = vunpack.c.0.s8 %v812
        %v814 = vlaneseq
        %v815 = vshrl.u32 %v814, 7
        %v816 = vsub.s32 %v813, %v815
        %v817 = vrot.slane %v803, %v816
        %v818 = vcombine.low %v793, %v801
        %v819 = vcombine.high %v793, %v801
        %v821 = vunpack.c.l.s4 1934713408
        %v822 = vunpack.c.0.s8 %v821
        %v823 = vlaneseq
        %v824 = vshrl.u32 %v823, 7
        %v825 = vsub.s32 %v822, %v824
        %v826 = vrot.slane %v818, %v825
        %v828 = vunpack.c.l.s4 1934713408
        %v829 = vunpack.c.0.s8 %v828
        %v830 = vlaneseq
        %v831 = vshrl.u32 %v830, 7
        %v832 = vsub.s32 %v829, %v831
        %v833 = vrot.slane %v819, %v832
        %v834 = vcombine.low %v810, %v826
        %v835 = vcombine.high %v810, %v826
        %v836 = vcombine.low %v817, %v833
        %v837 = vcombine.high %v817, %v833
        %v838 = vcombine.low %v742, %v749
        %v840 = vunpack.c.l.s4 1983009808
        %v841 = vunpack.c.0.s8 %v840
        %v842 = vlaneseq
        %v843 = vshrl.u32 %v842, 7
        %v844 = vsub.s32 %v841, %v843
        %v845 = vrot.slane %v838, %v844
        %v846 = vcombine.low %v766, %v767
        %v848 = vunpack.c.l.s4 1983009808
        %v849 = vunpack.c.0.s8 %v848
        %v850 = vlaneseq
        %v851 = vshrl.u32 %v850, 7
        %v852 = vsub.s32 %v849, %v851
        %v853 = vrot.slane %v846, %v852
        %v854 = vcombine.low %v758, %v765
        %v856 = vunpack.c.l.s4 1983009808
        %v857 = vunpack.c.0.s8 %v856
        %v858 = vlaneseq
        %v859 = vshrl.u32 %v858, 7
        %v860 = vsub.s32 %v857, %v859
        %v861 = vrot.slane %v854, %v860
        %v862 = vcombine.low %v768, %v769
        %v864 = vunpack.c.l.s4 1983009808
        %v865 = vunpack.c.0.s8 %v864
        %v866 = vlaneseq
        %v867 = vshrl.u32 %v866, 7
        %v868 = vsub.s32 %v865, %v867
        %v869 = vrot.slane %v862, %v868
        %v870 = vcombine.low %v845, %v853
        %v871 = vcombine.high %v845, %v853
        %v873 = vunpack.c.l.s4 1934713408
        %v874 = vunpack.c.0.s8 %v873
        %v875 = vlaneseq
        %v876 = vshrl.u32 %v875, 7
        %v877 = vsub.s32 %v874, %v876
        %v878 = vrot.slane %v870, %v877
        %v880 = vunpack.c.l.s4 1934713408
        %v881 = vunpack.c.0.s8 %v880
        %v882 = vlaneseq
        %v883 = vshrl.u32 %v882, 7
        %v884 = vsub.s32 %v881, %v883
        %v885 = vrot.slane %v871, %v884
        %v886 = vcombine.low %v861, %v869
        %v887 = vcombine.high %v861, %v869
        %v889 = vunpack.c.l.s4 1934713408
        %v890 = vunpack.c.0.s8 %v889
        %v891 = vlaneseq
        %v892 = vshrl.u32 %v891, 7
        %v893 = vsub.s32 %v890, %v892
        %v894 = vrot.slane %v886, %v893
        %v896 = vunpack.c.l.s4 1934713408
        %v897 = vunpack.c.0.s8 %v896
        %v898 = vlaneseq
        %v899 = vshrl.u32 %v898, 7
        %v900 = vsub.s32 %v897, %v899
        %v901 = vrot.slane %v887, %v900
        %v902 = vcombine.low %v878, %v894
        %v903 = vcombine.high %v878, %v894
        %v904 = vcombine.low %v885, %v901
        %v905 = vcombine.high %v885, %v901
        %v906 = vcombine.low %v834, %v836
        %v907 = vcombine.high %v834, %v836
        %v909 = vunpack.c.l.s4 1983009808
        %v910 = vunpack.c.0.s8 %v909
        %v911 = vlaneseq
        %v912 = vshrl.u32 %v911, 7
        %v913 = vsub.s32 %v910, %v912
        %v914 = vrot.slane %v906, %v913
        %v916 = vunpack.c.l.s4 1983009808
        %v917 = vunpack.c.0.s8 %v916
        %v918 = vlaneseq
        %v919 = vshrl.u32 %v918, 7
        %v920 = vsub.s32 %v917, %v919
        %v921 = vrot.slane %v907, %v920
        %v922 = vcombine.low %v835, %v837
        %v923 = vcombine.high %v835, %v837
        %v925 = vunpack.c.l.s4 1983009808
        %v926 = vunpack.c.0.s8 %v925
        %v927 = vlaneseq
        %v928 = vshrl.u32 %v927, 7
        %v929 = vsub.s32 %v926, %v928
        %v930 = vrot.slane %v922, %v929
        %v932 = vunpack.c.l.s4 1983009808
        %v933 = vunpack.c.0.s8 %v932
        %v934 = vlaneseq
        %v935 = vshrl.u32 %v934, 7
        %v936 = vsub.s32 %v933, %v935
        %v937 = vrot.slane %v923, %v936
        %v938 = vcombine.low %v914, %v930
        %v939 = vcombine.high %v914, %v930
        %v941 = vunpack.c.l.s4 1934713408
        %v942 = vunpack.c.0.s8 %v941
        %v943 = vlaneseq
        %v944 = vshrl.u32 %v943, 7
        %v945 = vsub.s32 %v942, %v944
        %v946 = vrot.slane %v938, %v945
        %v948 = vunpack.c.l.s4 1934713408
        %v949 = vunpack.c.0.s8 %v948
        %v950 = vlaneseq
        %v951 = vshrl.u32 %v950, 7
        %v952 = vsub.s32 %v949, %v951
        %v953 = vrot.slane %v939, %v952
        %v954 = vcombine.low %v921, %v937
        %v955 = vcombine.high %v921, %v937
        %v957 = vunpack.c.l.s4 1934713408
        %v958 = vunpack.c.0.s8 %v957
        %v959 = vlaneseq
        %v960 = vshrl.u32 %v959, 7
        %v961 = vsub.s32 %v958, %v960
        %v962 = vrot.slane %v954, %v961
        %v964 = vunpack.c.l.s4 1934713408
        %v965 = vunpack.c.0.s8 %v964
        %v966 = vlaneseq
        %v967 = vshrl.u32 %v966, 7
        %v968 = vsub.s32 %v965, %v967
        %v969 = vrot.slane %v955, %v968
        %v970 = vcombine.high %v946, 0.0
        %v971 = vcombine.high %v953, 0.0
        %v972 = vcombine.high %v962, 0.0
        %v973 = vcombine.high %v969, 0.0
        %v974 = vcombine.low %v902, %v904
        %v975 = vcombine.high %v902, %v904
        %v977 = vunpack.c.l.s4 1983009808
        %v978 = vunpack.c.0.s8 %v977
        %v979 = vlaneseq
        %v980 = vshrl.u32 %v979, 7
        %v981 = vsub.s32 %v978, %v980
        %v982 = vrot.slane %v974, %v981
        %v984 = vunpack.c.l.s4 1983009808
        %v985 = vunpack.c.0.s8 %v984
        %v986 = vlaneseq
        %v987 = vshrl.u32 %v986, 7
        %v988 = vsub.s32 %v985, %v987
        %v989 = vrot.slane %v975, %v988
        %v990 = vcombine.low %v903, %v905
        %v991 = vcombine.high %v903, %v905
        %v993 = vunpack.c.l.s4 1983009808
        %v994 = vunpack.c.0.s8 %v993
        %v995 = vlaneseq
        %v996 = vshrl.u32 %v995, 7
        %v997 = vsub.s32 %v994, %v996
        %v998 = vrot.slane %v990, %v997
        %v1000 = vunpack.c.l.s4 1983009808
        %v1001 = vunpack.c.0.s8 %v1000
        %v1002 = vlaneseq
        %v1003 = vshrl.u32 %v1002, 7
        %v1004 = vsub.s32 %v1001, %v1003
        %v1005 = vrot.slane %v991, %v1004
        %v1006 = vcombine.low %v982, %v998
        %v1007 = vcombine.high %v982, %v998
        %v1009 = vunpack.c.l.s4 1934713408
        %v1010 = vunpack.c.0.s8 %v1009
        %v1011 = vlaneseq
        %v1012 = vshrl.u32 %v1011, 7
        %v1013 = vsub.s32 %v1010, %v1012
        %v1014 = vrot.slane %v1006, %v1013
        %v1016 = vunpack.c.l.s4 1934713408
        %v1017 = vunpack.c.0.s8 %v1016
        %v1018 = vlaneseq
        %v1019 = vshrl.u32 %v1018, 7
        %v1020 = vsub.s32 %v1017, %v1019
        %v1021 = vrot.slane %v1007, %v1020
        %v1022 = vcombine.low %v989, %v1005
        %v1023 = vcombine.high %v989, %v1005
        %v1025 = vunpack.c.l.s4 1934713408
        %v1026 = vunpack.c.0.s8 %v1025
        %v1027 = vlaneseq
        %v1028 = vshrl.u32 %v1027, 7
        %v1029 = vsub.s32 %v1026, %v1028
        %v1030 = vrot.slane %v1022, %v1029
        %v1032 = vunpack.c.l.s4 1934713408
        %v1033 = vunpack.c.0.s8 %v1032
        %v1034 = vlaneseq
        %v1035 = vshrl.u32 %v1034, 7
        %v1036 = vsub.s32 %v1033, %v1035
        %v1037 = vrot.slane %v1023, %v1036
        %v1038 = vcombine.high %v1014, 0.0
        %v1039 = vcombine.high %v1021, 0.0
        %v1040 = vcombine.high %v1030, 0.0
        %v1041 = vcombine.high %v1037, 0.0
        %1043 = vrot.lane.b32.xlu0 %v970, 16
        %v1044 = vpop.permute.xlu0 %1043
        %1047 = vrot.lane.b32.xlu0 %v953, 32
        %v1048 = vpop.permute.xlu0 %1047
        %1051 = vrot.lane.b32.xlu0 %v971, 48
        %v1052 = vpop.permute.xlu0 %1051
        %1055 = vrot.lane.b32.xlu0 %v962, 64
        %v1056 = vpop.permute.xlu0 %1055
        %1059 = vrot.lane.b32.xlu0 %v972, 80
        %v1060 = vpop.permute.xlu0 %1059
        %1063 = vrot.lane.b32.xlu0 %v969, 96
        %v1064 = vpop.permute.xlu0 %1063
        %1067 = vrot.lane.b32.xlu0 %v973, 112
        %v1068 = vpop.permute.xlu0 %1067
        %1071 = vrot.lane.b32.xlu0 %v1038, 16
        %v1072 = vpop.permute.xlu0 %1071
        %1075 = vrot.lane.b32.xlu0 %v1021, 32
        %v1076 = vpop.permute.xlu0 %1075
        %1079 = vrot.lane.b32.xlu0 %v1039, 48
        %v1080 = vpop.permute.xlu0 %1079
        %1083 = vrot.lane.b32.xlu0 %v1030, 64
        %v1084 = vpop.permute.xlu0 %1083
        %1087 = vrot.lane.b32.xlu0 %v1040, 80
        %v1088 = vpop.permute.xlu0 %1087
        %1091 = vrot.lane.b32.xlu0 %v1037, 96
        %v1092 = vpop.permute.xlu0 %1091
        %1095 = vrot.lane.b32.xlu0 %v1041, 112
        %v1096 = vpop.permute.xlu0 %1095
        %v1098 = vsel %vm524, %v946, %v1044
        %v1099 = vsel %vm527, %v1098, %v1048
        %v1100 = vsel %vm530, %v1099, %v1052
        %vm1101 = vcmask 523264
        %v1102 = vsel %vm1101, %v1100, %v1056
        %vm1103 = vcmask 654336
        %v1104 = vsel %vm1103, %v1102, %v1060
        %vm1105 = vcmask 785408
        %v1106 = vsel %vm1105, %v1104, %v1064
        %vm1107 = vcmask 916480
        %v1108 = vsel %vm1107, %v1106, %v1068
        %v1109 = vsel %vm524, %v1014, %v1072
        %v1110 = vsel %vm527, %v1109, %v1076
        %v1111 = vsel %vm530, %v1110, %v1080
        %v1112 = vsel %vm1101, %v1111, %v1084
        %v1113 = vsel %vm1103, %v1112, %v1088
        %v1114 = vsel %vm1105, %v1113, %v1092
        %v1115 = vsel %vm1107, %v1114, %v1096
        %1117 = vset.pattern.permute.xlu0 0
        %1118 = vperm.xlu0 %1117, %v219
        %v1119 = vpop.permute.xlu0 %1118
        %vm1121 = vcmask 31744
        %v1123 = vsel %vm1121, %v218, 0
        %vm1125 = vcmask 1043456
        %v1127 = vsel %vm1125, %v1108, 0
        %v1130 = vsel %vm1125, %v1115, 0
        %1132 = vmatprep.subr.mxu0 %v1130
        %1133 = vmatpush1.msra.mxu0 %v1127
        %1134 = vmatprep.subr.mxu0 0.0
        %1135 = vmatpush1.msra.mxu0 0.0
        %1136 = vmatprep.subr.mxu0 0.0
        %1137 = vmatpush1.msra.mxu0 0.0
        %1138 = vmatprep.subr.mxu0 0.0
        %1139 = vmatpush1.msra.mxu0 0.0
        %1140 = vmatprep.subr.mxu0 0.0
        %1141 = vmatpush1.msra.mxu0 0.0
        %1142 = vmatprep.subr.mxu0 0.0
        %1143 = vmatpush1.msra.mxu0 0.0
        %1144 = vmatprep.subr.mxu0 0.0
        %1145 = vmatpush1.msra.mxu0 0.0
        %1146 = vmatprep.subr.mxu0 0.0
        %1147 = vmatpush1.msra.mxu0 0.0
        %1148 = vmatprep.subr.mxu0 0.0
        %1149 = vmatpush1.msra.mxu0 0.0
        %1150 = vmatprep.subr.mxu0 0.0
        %1151 = vmatpush1.msra.mxu0 0.0
        %1152 = vmatprep.subr.mxu0 0.0
        %1153 = vmatpush1.msra.mxu0 0.0
        %1154 = vmatprep.subr.mxu0 0.0
        %1155 = vmatpush1.msra.mxu0 0.0
        %1156 = vmatprep.subr.mxu0 0.0
        %1157 = vmatpush1.msra.mxu0 0.0
        %1158 = vmatprep.subr.mxu0 0.0
        %1159 = vmatpush1.msra.mxu0 0.0
        %1160 = vmatprep.subr.mxu0 0.0
        %1161 = vmatpush1.msra.mxu0 0.0
        %1162 = vmatprep.subr.mxu0 0.0
        %1163 = vmatpush1.msra.mxu0 0.0
        %1164 = vmatprep.subr.mxu0 0.0
        %1165 = vmatpush1.msra.mxu0 0.0
        %1166 = vmatprep.subr.mxu0 0.0
        %1167 = vmatpush1.msra.mxu0 0.0
        %1168 = vmatprep.subr.mxu0 0.0
        %1169 = vmatpush1.msra.mxu0 0.0
        %1170 = vmatprep.subr.mxu0 0.0
        %1171 = vmatpush1.msra.mxu0 0.0
        %1172 = vmatprep.subr.mxu0 0.0
        %1173 = vmatpush1.msra.mxu0 0.0
        %1174 = vmatprep.subr.mxu0 0.0
        %1175 = vmatpush1.msra.mxu0 0.0
        %1176 = vmatprep.subr.mxu0 0.0
        %1177 = vmatpush1.msra.mxu0 0.0
        %1178 = vmatprep.subr.mxu0 0.0
        %1179 = vmatpush1.msra.mxu0 0.0
        %1180 = vmatprep.subr.mxu0 0.0
        %1181 = vmatpush1.msra.mxu0 0.0
        %1182 = vmatprep.subr.mxu0 0.0
        %1183 = vmatpush1.msra.mxu0 0.0
        %1184 = vmatprep.subr.mxu0 0.0
        %1185 = vmatpush1.msra.mxu0 0.0
        %1186 = vmatprep.subr.mxu0 0.0
        %1187 = vmatpush1.msra.mxu0 0.0
        %1188 = vmatprep.subr.mxu0 0.0
        %1189 = vmatpush1.msra.mxu0 0.0
        %1190 = vmatprep.subr.mxu0 0.0
        %1191 = vmatpush1.msra.mxu0 0.0
        %1192 = vmatprep.subr.mxu0 0.0
        %1193 = vmatpush1.msra.mxu0 0.0
        %1194 = vmatprep.subr.mxu0 0.0
        %1195 = vmatpush1.msra.mxu0 0.0
        %1196 = vmatprep.mubr.f32.mxu0 0.0
        %1197 = vmatmul.mubr.f32.gmra.mrb[0].mxu0 %v1123
        %v1198 = vpop.f32.mrb[0].mxu0
        %v1199 = vadd.f32 %v1119, %v1198
        %v1200 = vpop.f32.mrb[0].mxu0
        %v1201 = vadd.f32 %v1119, %v1200
        %1202 = vdwg.mxu0
        %1203 = vst [vmem:[%s215] sm:$0xff] %v1199
        %1204 = vst [vmem:[%s215 + $0x8] sm:$0xff] %v1201
        %s1205 = sand.u32 %s118, 1
        %s1206 = scalar_lea.sflag [#allocation4], %s1205
        %s1207 = sand.u32 %s118, 1
        %s1208 = smul.addr %s1207, 16
        %s1209 = scalar_lea.vmem [#allocation5], %s1208
        // Predicated region
        $region41: #{tpu_custom_call.1} parent=35 // pred_check
          %p1210 = pneg %p128
        $region42: #{tpu_custom_call.1} parent=35 // pred_check_branch
          %1212 = sbr.rel (%p1210) target = $region44
        $region43: #{tpu_custom_call.1} parent=35 // pred_region
          %s1214 = ssub.s32 256, 256
          %1215 = vsyncadd %s1206, %s1214
          %s1216 = smul.addr %s21, 2
          %s1217 = smul.addr %s1216, 128
          %s1218 = scalar_lea.hbm %s4, %s1217
          %s1220 = sshll.u32 %s1209, 4
          %s1221 = int_to_ptr.vmem [resolvable:$true] %s1220
          %1223 = dma.vmem_to_hbm [thread:$0]  %s1221, 256, %s1218, %s1206
        $region44: #{tpu_custom_call.1} parent=35 // pred_fallthru
          _
      $region36: #{tpu_custom_call.1} parent=5 // pred_fallthru
        _
      %p1224 = scmp.le.s32.totalorder 2, %s16
      // Predicated region
      $region45: #{tpu_custom_call.1} parent=5 // pred_check
        %p1225 = pneg %p1224
      $region46: #{tpu_custom_call.1} parent=5 // pred_check_branch
        %1227 = sbr.rel (%p1225) target = $region48
      $region47: #{tpu_custom_call.1} parent=5 // pred_region
        %s1228 = ssub.s32 %s16, 2
        // Predicated region
        $region49: #{tpu_custom_call.1} parent=47 // pred_check
          %p1229 = pneg %p134
        $region50: #{tpu_custom_call.1} parent=47 // pred_check_branch
          %1231 = sbr.rel (%p1229) target = $region52
        $region51: #{tpu_custom_call.1} parent=47 // pred_region
          %s1232 = sand.u32 %s119, 1
          %s1233 = scalar_lea.sflag [#allocation4], %s1232
          %s1234 = sand.u32 %s119, 1
          %s1235 = smul.addr %s1234, 16
          %s1236 = scalar_lea.vmem [#allocation5], %s1235
          %1237 = dma.done %s1233, 256
        $region52: #{tpu_custom_call.1} parent=47 // pred_fallthru
          _
      $region48: #{tpu_custom_call.1} parent=5 // pred_fallthru
        _
    $region6: #{tpu_custom_call.1} parent=1 // loop_footer
      %s20 = sadd.s32 1, %s16
    $region7: #{tpu_custom_call.1} parent=1 // loop_footer_branch
      %15 = sbr.rel target = $region3
    $region8: #{tpu_custom_call.1} parent=1 // loop_exit
      _
    %1238 = vsyncpa [#allocation3], 1
    %s1239 = scalar_lea.sflag [#allocation3], 1
    %1240 = vsyncpa %s1239, 1
    %1241 = vsyncpa [#allocation4], 1
    %s1242 = scalar_lea.sflag [#allocation4], 1
    %1243 = vsyncpa %s1242, 1

</llo_original>
